<compile_context>
chip_gen: v7x
topology: tpu7x:2x2x1
jax: 0.10.0
libtpu: 0.0.40
codegen_flags: <defaults>
</compile_context>

<pallas_src>
from functools import partial

import numpy as np
import jax
import jax.numpy as jnp
from jax.experimental import pallas as pl
from jax.experimental.pallas import tpu as pltpu


def _round_up(a, b):
    return (a + b - 1) // b * b


def _default_tile_rows():
    # v7x has 64 MiB VMEM per TensorCore (vs 128 MiB on v5e/v6e): use smaller row tiles there.
    try:
        kind = jax.devices()[0].device_kind.lower()
    except Exception:
        return 512
    return 256 if "v7" in kind else 512


def _ffn_kernel(x_ref, w1_ref, b1_ref, w2_ref, b2_ref, g_ref, beta_ref,
                o_ref, acc_ref, *, eps):
    k = pl.program_id(1)

    @pl.when(k == 0)
    def _():
        acc_ref[...] = jnp.zeros_like(acc_ref)

    # --- two MXU matmuls in native (ideally bf16) dtype, f32 accumulation ---
    w1 = w1_ref[...]                                   # (d_in, tk)
    x_mm = x_ref[...]                                  # (T, d_in)
    if x_mm.dtype != w1.dtype:
        x_mm = x_mm.astype(w1.dtype)
    h = jnp.dot(x_mm, w1, preferred_element_type=jnp.float32)        # (T, tk) f32
    h = h + b1_ref[...].astype(jnp.float32)
    h = jax.nn.gelu(h, approximate=True)                              # f32 elementwise (VPU/EUP)
    acc_ref[...] += jnp.dot(h.astype(w2_ref.dtype), w2_ref[...],
                            preferred_element_type=jnp.float32)       # (T, d_in) f32

    # --- epilogue on the last d_hid chunk: bias + residual + LayerNorm ---
    @pl.when(k == pl.num_programs(1) - 1)
    def _():
        y = acc_ref[...] + b2_ref[...].astype(jnp.float32)
        y = y + x_ref[...].astype(jnp.float32)                        # residual in f32
        mean = jnp.mean(y, axis=-1, keepdims=True)
        cent = y - mean
        var = jnp.mean(cent * cent, axis=-1, keepdims=True)
        yn = cent * jax.lax.rsqrt(var + eps)
        out = yn * g_ref[...].astype(jnp.float32) + beta_ref[...].astype(jnp.float32)
        o_ref[...] = out.astype(o_ref.dtype)


def positionwise_ffn(x, w1, b1, w2, b2, gamma, beta, *, eps=1e-6,
                     tile_rows=None, max_hid_tile=2048, param_dtype=None):
    """
    x:     (B, S, d_in)
    w1:    (d_hid, d_in)  PyTorch Linear layout (out, in);  b1: (d_hid,)
    w2:    (d_in, d_hid);                                   b2: (d_in,)
    gamma/beta: (d_in,)   LayerNorm affine params.
    Returns LayerNorm(w2(gelu(w1(x))) + x), shape (B, S, d_in).
    """
    B, S, d_in = x.shape
    d_hid = w1.shape[0]
    R = B * S

    # --- wrapper-side layout plumbing (one-time / cheap) ---
    x2 = x.reshape(R, d_in)                            # lane-dense 2D row slab (no padding)
    w1_t = jnp.transpose(w1)                           # (d_in, d_hid)
    w2_t = jnp.transpose(w2)                           # (d_hid, d_in)
    if param_dtype is not None:
        w1_t = w1_t.astype(param_dtype)
        w2_t = w2_t.astype(param_dtype)
    b1_r = b1.reshape(1, d_hid)
    b2_r = b2.reshape(1, d_in)
    g_r = gamma.reshape(1, d_in)
    be_r = beta.reshape(1, d_in)

    # --- d_hid tiling ("arbitrary" reduction axis); weights zero-padded so tk divides exactly
    #     (zero columns of W1 / zero b1 -> gelu(0)=0 -> zero contribution; exact) ---
    nk = pl.cdiv(d_hid, max_hid_tile)
    tk = _round_up(pl.cdiv(d_hid, nk), 128)
    d_hid_pad = tk * nk
    if d_hid_pad != d_hid:
        pad = d_hid_pad - d_hid
        w1_t = jnp.pad(w1_t, ((0, 0), (0, pad)))
        b1_r = jnp.pad(b1_r, ((0, 0), (0, pad)))
        w2_t = jnp.pad(w2_t, ((0, pad), (0, 0)))

    # --- row tiling (generation-aware); ragged tail block handled by Pallas ---
    if tile_rows is None:
        tile_rows = _default_tile_rows()
    tile = max(8, min(_round_up(tile_rows, 8), _round_up(R, 8)))
    grid = (pl.cdiv(R, tile), nk)

    # --- VMEM budget from actual block sizes (+50% headroom) ---
    xb = x2.dtype.itemsize
    wb = w1_t.dtype.itemsize
    ob = x.dtype.itemsize
    wbuf = 1 if nk == 1 else 2                        # weight chunks double-buffer only if re-fetched
    need = (
        2 * tile * d_in * xb                          # x blocks (double buffered)
        + 2 * tile * d_in * ob                        # out blocks (double buffered)
        + wbuf * (d_in * tk + tk) * wb                # W1^T chunk + b1 chunk
        + wbuf * tk * d_in * wb                       # W2^T chunk
        + 3 * d_in * 4                                # b2 / gamma / beta
        + tile * d_in * 4                             # f32 accumulator scratch
        + 2 * tile * tk * 4                           # f32 h intermediate + temp headroom
    )
    vmem_limit = int(min(max(need * 3 // 2, 32 * 1024 * 1024), 100 * 1024 * 1024))

    cost = pl.CostEstimate(
        flops=4 * R * d_in * d_hid,
        transcendentals=R * d_hid,
        bytes_accessed=int(x2.size * xb + R * d_in * ob
                           + (w1_t.size + w2_t.size) * wb
                           + (b1_r.size + b2_r.size + g_r.size + be_r.size) * 4),
    )

    def _run(single_buffer_params):
        if single_buffer_params:
            small_kw = dict(pipeline_mode=pl.Buffered(1))
            # weight chunks are only never-re-fetched (constant index) when d_hid is untiled
            w_kw = small_kw if nk == 1 else {}
        else:
            small_kw, w_kw = {}, {}

        in_specs = [
            pl.BlockSpec((tile, d_in), lambda i, k: (i, 0)),            # x rows (pipelined)
            pl.BlockSpec((d_in, tk), lambda i, k: (0, k), **w_kw),      # W1^T chunk
            pl.BlockSpec((1, tk), lambda i, k: (0, k), **w_kw),         # b1 chunk
            pl.BlockSpec((tk, d_in), lambda i, k: (k, 0), **w_kw),      # W2^T chunk
            pl.BlockSpec((1, d_in), lambda i, k: (0, 0), **small_kw),   # b2
            pl.BlockSpec((1, d_in), lambda i, k: (0, 0), **small_kw),   # gamma
            pl.BlockSpec((1, d_in), lambda i, k: (0, 0), **small_kw),   # beta
        ]
        return pl.pallas_call(
            partial(_ffn_kernel, eps=eps),
            out_shape=jax.ShapeDtypeStruct((R, d_in), x.dtype),
            grid=grid,
            in_specs=in_specs,
            out_specs=pl.BlockSpec((tile, d_in), lambda i, k: (i, 0)),
            scratch_shapes=[pltpu.VMEM((tile, d_in), jnp.float32)],
            compiler_params=pltpu.CompilerParams(
                dimension_semantics=("parallel", "arbitrary"),
                vmem_limit_bytes=vmem_limit,
            ),
            cost_estimate=cost,
        )(x2, w1_t, b1_r, w2_t, b2_r, g_r, be_r)

    try:
        out = _run(True)
    except Exception:
        # TODO(synk): this jax/Mosaic build rejected pl.Buffered(1) single-buffering of the
        # resident parameter blocks; falling back to default double-buffered pipelining.
        out = _run(False)

    return out.reshape(B, S, d_in)


def _reference(x, w1, b1, w2, b2, gamma, beta, eps=1e-6):
    """Pure-JAX reference with the same math (tanh-GELU), high-precision dots."""
    hp = jax.lax.Precision.HIGHEST
    h = jnp.dot(x, w1.T, precision=hp) + b1
    h = jax.nn.gelu(h, approximate=True)
    y = jnp.dot(h, w2.T, precision=hp) + b2
    y = y + x
    mean = y.mean(-1, keepdims=True)
    var = ((y - mean) ** 2).mean(-1, keepdims=True)
    return (y - mean) * jax.lax.rsqrt(var + eps) * gamma + beta


if __name__ == "__main__":
    # d_in is a multiple of 128 so output stores are lane-dense (unmasked vst).
    B, S, d_in, d_hid = 2, 8, 128, 256

    key = jax.random.PRNGKey(0)
    kx, k1, k2, k3, k4 = jax.random.split(key, 5)

    x = jax.random.normal(kx, (B, S, d_in), dtype=jnp.float32)
    # PyTorch nn.Linear layout: weight (out_features, in_features), bias (out_features,)
    w1 = jax.random.normal(k1, (d_hid, d_in), dtype=jnp.float32) * 0.1
    b1 = jax.random.normal(k2, (d_hid,), dtype=jnp.float32) * 0.1
    w2 = jax.random.normal(k3, (d_in, d_hid), dtype=jnp.float32) * 0.1
    b2 = jax.random.normal(k4, (d_in,), dtype=jnp.float32) * 0.1
    gamma = jnp.ones((d_in,), dtype=jnp.float32)
    beta = jnp.zeros((d_in,), dtype=jnp.float32)

    ref = _reference(x, w1, b1, w2, b2, gamma, beta)

    # f32 validation path: operands fed to the MXU in their native f32 dtype (no upcasts).
    out = positionwise_ffn(x, w1, b1, w2, b2, gamma, beta)
    out = jax.block_until_ready(out)
    assert out.shape == (B, S, d_in)
    np.testing.assert_allclose(np.asarray(out), np.asarray(ref), rtol=1e-3, atol=1e-3)

    # bf16 production path: bf16 activations + bf16 resident weights (bf16-native MXU).
    out_bf16 = positionwise_ffn(x.astype(jnp.bfloat16), w1, b1, w2, b2, gamma, beta,
                                param_dtype=jnp.bfloat16)
    out_bf16 = jax.block_until_ready(out_bf16)
    np.testing.assert_allclose(np.asarray(out_bf16.astype(jnp.float32)), np.asarray(ref),
                               rtol=1e-1, atol=1e-1)

    print("KERNEL_OK")
</pallas_src>

<mosaic_0001>
module attributes {stable_mosaic.version = 11 : i64} {
  func.func @_ffn_kernel(%arg0: i32, %arg1: i32, %arg2: memref<16x128xf32, #tpu.memory_space<vmem>>, %arg3: memref<128x256xf32, #tpu.memory_space<vmem>>, %arg4: memref<1x256xf32, #tpu.memory_space<vmem>>, %arg5: memref<256x128xf32, #tpu.memory_space<vmem>>, %arg6: memref<1x128xf32, #tpu.memory_space<vmem>>, %arg7: memref<1x128xf32, #tpu.memory_space<vmem>>, %arg8: memref<1x128xf32, #tpu.memory_space<vmem>>, %arg9: memref<16x128xf32, #tpu.memory_space<vmem>>, %arg10: memref<16x128xf32, #tpu.memory_space<vmem>>) attributes {dimension_semantics = [#tpu.dimension_semantics<parallel>, #tpu.dimension_semantics<arbitrary>], iteration_bounds = array<i64: 1, 1>, scalar_prefetch = 0 : i64, scratch_operands = 1 : i64, tpu.core_type = #tpu.core_type<tc>, window_params = [{transform_indices = @transform_0, window_bounds = array<i64: 16, 128>}, {pipeline_mode = #tpu.pipeline_mode<synchronous>, transform_indices = @transform_1, window_bounds = array<i64: 128, 256>}, {pipeline_mode = #tpu.pipeline_mode<synchronous>, transform_indices = @transform_2, window_bounds = array<i64: 1, 256>}, {pipeline_mode = #tpu.pipeline_mode<synchronous>, transform_indices = @transform_3, window_bounds = array<i64: 256, 128>}, {pipeline_mode = #tpu.pipeline_mode<synchronous>, transform_indices = @transform_4, window_bounds = array<i64: 1, 128>}, {pipeline_mode = #tpu.pipeline_mode<synchronous>, transform_indices = @transform_5, window_bounds = array<i64: 1, 128>}, {pipeline_mode = #tpu.pipeline_mode<synchronous>, transform_indices = @transform_6, window_bounds = array<i64: 1, 128>}, {transform_indices = @transform_7, window_bounds = array<i64: 16, 128>}]} {
    %c0_i32 = arith.constant 0 : i32
    %0 = arith.cmpi eq, %arg1, %c0_i32 : i32
    %1 = arith.extui %0 : i1 to i32
    %c0_i32_0 = arith.constant 0 : i32
    %2 = arith.cmpi ne, %1, %c0_i32_0 : i32
    scf.if %2 {
      %cst_19 = arith.constant 0.000000e+00 : f32
      %30 = vector.broadcast %cst_19 : f32 to vector<16x128xf32>
      %c0_20 = arith.constant 0 : index
      %c0_21 = arith.constant 0 : index
      %31 = vector.load %arg10[%c0_20, %c0_21] : memref<16x128xf32, #tpu.memory_space<vmem>>, vector<16x128xf32>
      tpu.vector_store %arg10[%c0_20, %c0_21], %30 {strides = array<i32>} : memref<16x128xf32, #tpu.memory_space<vmem>>, vector<16x128xf32>,
    } else {
    }
    %c0 = arith.constant 0 : index
    %c0_1 = arith.constant 0 : index
    %3 = vector.load %arg3[%c0, %c0_1] : memref<128x256xf32, #tpu.memory_space<vmem>>, vector<128x256xf32>
    %c0_2 = arith.constant 0 : index
    %c0_3 = arith.constant 0 : index
    %4 = vector.load %arg2[%c0_2, %c0_3] : memref<16x128xf32, #tpu.memory_space<vmem>>, vector<16x128xf32>
    %cst = arith.constant dense<0.000000e+00> : vector<16x256xf32>
    %5 = tpu.matmul %4, %3, %cst {dimension_numbers = #tpu.dot_dimension_numbers<[1], [0], [0], [1], [0, 0, 1, 1], [], []>} : vector<16x128xf32>, vector<128x256xf32>, vector<16x256xf32> -> vector<16x256xf32>
    %c0_4 = arith.constant 0 : index
    %c0_5 = arith.constant 0 : index
    %6 = vector.load %arg4[%c0_4, %c0_5] : memref<1x256xf32, #tpu.memory_space<vmem>>, vector<1x256xf32>
    %7 = vector.broadcast %6 : vector<1x256xf32> to vector<16x256xf32>
    %8 = arith.addf %5, %7 : vector<16x256xf32>
    %9 = arith.mulf %8, %8 : vector<16x256xf32>
    %10 = arith.mulf %8, %9 : vector<16x256xf32>
    %cst_6 = arith.constant 4.471500e-02 : f32
    %11 = vector.broadcast %cst_6 : f32 to vector<16x256xf32>
    %12 = arith.mulf %11, %10 : vector<16x256xf32>
    %13 = arith.addf %8, %12 : vector<16x256xf32>
    %cst_7 = arith.constant 0.797884583 : f32
    %14 = vector.broadcast %cst_7 : f32 to vector<16x256xf32>
    %15 = arith.mulf %14, %13 : vector<16x256xf32>
    %16 = math.tanh %15 : vector<16x256xf32>
    %cst_8 = arith.constant 1.000000e+00 : f32
    %17 = vector.broadcast %cst_8 : f32 to vector<16x256xf32>
    %18 = arith.addf %17, %16 : vector<16x256xf32>
    %cst_9 = arith.constant 5.000000e-01 : f32
    %19 = vector.broadcast %cst_9 : f32 to vector<16x256xf32>
    %20 = arith.mulf %19, %18 : vector<16x256xf32>
    %21 = arith.mulf %8, %20 : vector<16x256xf32>
    %c0_10 = arith.constant 0 : index
    %c0_11 = arith.constant 0 : index
    %22 = vector.load %arg10[%c0_10, %c0_11] : memref<16x128xf32, #tpu.memory_space<vmem>>, vector<16x128xf32>
    %c0_12 = arith.constant 0 : index
    %c0_13 = arith.constant 0 : index
    %23 = vector.load %arg5[%c0_12, %c0_13] : memref<256x128xf32, #tpu.memory_space<vmem>>, vector<256x128xf32>
    %cst_14 = arith.constant dense<0.000000e+00> : vector<16x128xf32>
    %24 = tpu.matmul %21, %23, %cst_14 {dimension_numbers = #tpu.dot_dimension_numbers<[1], [0], [0], [1], [0, 0, 1, 1], [], []>} : vector<16x256xf32>, vector<256x128xf32>, vector<16x128xf32> -> vector<16x128xf32>
    %25 = arith.addf %22, %24 : vector<16x128xf32>
    %c0_15 = arith.constant 0 : index
    %c0_16 = arith.constant 0 : index
    %26 = vector.load %arg10[%c0_15, %c0_16] : memref<16x128xf32, #tpu.memory_space<vmem>>, vector<16x128xf32>
    tpu.vector_store %arg10[%c0_15, %c0_16], %25 {strides = array<i32>} : memref<16x128xf32, #tpu.memory_space<vmem>>, vector<16x128xf32>,
    %c0_i32_17 = arith.constant 0 : i32
    %27 = arith.cmpi eq, %arg1, %c0_i32_17 : i32
    %28 = arith.extui %27 : i1 to i32
    %c0_i32_18 = arith.constant 0 : i32
    %29 = arith.cmpi ne, %28, %c0_i32_18 : i32
    scf.if %29 {
      %c0_19 = arith.constant 0 : index
      %c0_20 = arith.constant 0 : index
      %30 = vector.load %arg10[%c0_19, %c0_20] : memref<16x128xf32, #tpu.memory_space<vmem>>, vector<16x128xf32>
      %c0_21 = arith.constant 0 : index
      %c0_22 = arith.constant 0 : index
      %31 = vector.load %arg6[%c0_21, %c0_22] : memref<1x128xf32, #tpu.memory_space<vmem>>, vector<1x128xf32>
      %32 = vector.broadcast %31 : vector<1x128xf32> to vector<16x128xf32>
      %33 = arith.addf %30, %32 : vector<16x128xf32>
      %c0_23 = arith.constant 0 : index
      %c0_24 = arith.constant 0 : index
      %34 = vector.load %arg2[%c0_23, %c0_24] : memref<16x128xf32, #tpu.memory_space<vmem>>, vector<16x128xf32>
      %35 = arith.addf %33, %34 : vector<16x128xf32>
      %cst_25 = arith.constant dense<0.000000e+00> : vector<16xf32>
      %36 = vector.multi_reduction <add>, %35, %cst_25 [1] : vector<16x128xf32> to vector<16xf32>
      %37 = vector.shape_cast %36 : vector<16xf32> to vector<16x1xf32>
      %cst_26 = arith.constant 1.280000e+02 : f32
      %38 = vector.broadcast %cst_26 : f32 to vector<16x1xf32>
      %39 = arith.divf %37, %38 : vector<16x1xf32>
      %40 = vector.broadcast %39 : vector<16x1xf32> to vector<16x128xf32>
      %41 = arith.subf %35, %40 : vector<16x128xf32>
      %42 = arith.mulf %41, %41 : vector<16x128xf32>
      %cst_27 = arith.constant dense<0.000000e+00> : vector<16xf32>
      %43 = vector.multi_reduction <add>, %42, %cst_27 [1] : vector<16x128xf32> to vector<16xf32>
      %44 = vector.shape_cast %43 : vector<16xf32> to vector<16x1xf32>
      %cst_28 = arith.constant 1.280000e+02 : f32
      %45 = vector.broadcast %cst_28 : f32 to vector<16x1xf32>
      %46 = arith.divf %44, %45 : vector<16x1xf32>
      %cst_29 = arith.constant 9.99999997E-7 : f32
      %47 = vector.broadcast %cst_29 : f32 to vector<16x1xf32>
      %48 = arith.addf %46, %47 : vector<16x1xf32>
      %49 = math.rsqrt %48 : vector<16x1xf32>
      %50 = vector.broadcast %49 : vector<16x1xf32> to vector<16x128xf32>
      %51 = arith.mulf %41, %50 : vector<16x128xf32>
      %c0_30 = arith.constant 0 : index
      %c0_31 = arith.constant 0 : index
      %52 = vector.load %arg7[%c0_30, %c0_31] : memref<1x128xf32, #tpu.memory_space<vmem>>, vector<1x128xf32>
      %53 = vector.broadcast %52 : vector<1x128xf32> to vector<16x128xf32>
      %54 = arith.mulf %51, %53 : vector<16x128xf32>
      %c0_32 = arith.constant 0 : index
      %c0_33 = arith.constant 0 : index
      %55 = vector.load %arg8[%c0_32, %c0_33] : memref<1x128xf32, #tpu.memory_space<vmem>>, vector<1x128xf32>
      %56 = vector.broadcast %55 : vector<1x128xf32> to vector<16x128xf32>
      %57 = arith.addf %54, %56 : vector<16x128xf32>
      %c0_34 = arith.constant 0 : index
      %c0_35 = arith.constant 0 : index
      %58 = vector.load %arg9[%c0_34, %c0_35] : memref<16x128xf32, #tpu.memory_space<vmem>>, vector<16x128xf32>
      tpu.vector_store %arg9[%c0_34, %c0_35], %57 {strides = array<i32>} : memref<16x128xf32, #tpu.memory_space<vmem>>, vector<16x128xf32>,
    } else {
    }
    return
  }
  func.func @transform_0(%arg0: i32, %arg1: i32) -> (i32, i32) {
    %c0_i32 = arith.constant 0 : i32
    %c0_i32_0 = arith.constant 0 : i32
    return %arg0, %c0_i32 : i32, i32
  }
  func.func @transform_1(%arg0: i32, %arg1: i32) -> (i32, i32) {
    %c0_i32 = arith.constant 0 : i32
    %c0_i32_0 = arith.constant 0 : i32
    return %c0_i32, %arg1 : i32, i32
  }
  func.func @transform_2(%arg0: i32, %arg1: i32) -> (i32, i32) {
    %c0_i32 = arith.constant 0 : i32
    %c0_i32_0 = arith.constant 0 : i32
    return %c0_i32, %arg1 : i32, i32
  }
  func.func @transform_3(%arg0: i32, %arg1: i32) -> (i32, i32) {
    %c0_i32 = arith.constant 0 : i32
    %c0_i32_0 = arith.constant 0 : i32
    return %arg1, %c0_i32 : i32, i32
  }
  func.func @transform_4(%arg0: i32, %arg1: i32) -> (i32, i32) {
    %c0_i32 = arith.constant 0 : i32
    %c0_i32_0 = arith.constant 0 : i32
    %c0_i32_1 = arith.constant 0 : i32
    return %c0_i32, %c0_i32_0 : i32, i32
  }
  func.func @transform_5(%arg0: i32, %arg1: i32) -> (i32, i32) {
    %c0_i32 = arith.constant 0 : i32
    %c0_i32_0 = arith.constant 0 : i32
    %c0_i32_1 = arith.constant 0 : i32
    return %c0_i32, %c0_i32_0 : i32, i32
  }
  func.func @transform_6(%arg0: i32, %arg1: i32) -> (i32, i32) {
    %c0_i32 = arith.constant 0 : i32
    %c0_i32_0 = arith.constant 0 : i32
    %c0_i32_1 = arith.constant 0 : i32
    return %c0_i32, %c0_i32_0 : i32, i32
  }
  func.func @transform_7(%arg0: i32, %arg1: i32) -> (i32, i32) {
    %c0_i32 = arith.constant 0 : i32
    %c0_i32_0 = arith.constant 0 : i32
    return %arg0, %c0_i32 : i32, i32
  }
}

module attributes {stable_mosaic.version = 11 : i64} {
  func.func @_ffn_kernel(%arg0: i32, %arg1: i32, %arg2: memref<16x128xf32, #tpu.memory_space<vmem>>, %arg3: memref<128x256xf32, #tpu.memory_space<vmem>>, %arg4: memref<1x256xf32, #tpu.memory_space<vmem>>, %arg5: memref<256x128xf32, #tpu.memory_space<vmem>>, %arg6: memref<1x128xf32, #tpu.memory_space<vmem>>, %arg7: memref<1x128xf32, #tpu.memory_space<vmem>>, %arg8: memref<1x128xf32, #tpu.memory_space<vmem>>, %arg9: memref<16x128xf32, #tpu.memory_space<vmem>>, %arg10: memref<16x128xf32, #tpu.memory_space<vmem>>) attributes {dimension_semantics = [#tpu.dimension_semantics<parallel>, #tpu.dimension_semantics<arbitrary>], iteration_bounds = array<i64: 1, 1>, scalar_prefetch = 0 : i64, scratch_operands = 1 : i64, tpu.core_type = #tpu.core_type<tc>, window_params = [{transform_indices = @transform_0, window_bounds = array<i64: 16, 128>}, {transform_indices = @transform_1, window_bounds = array<i64: 128, 256>}, {transform_indices = @transform_2, window_bounds = array<i64: 1, 256>}, {transform_indices = @transform_3, window_bounds = array<i64: 256, 128>}, {pipeline_mode = #tpu.pipeline_mode<synchronous>, transform_indices = @transform_4, window_bounds = array<i64: 1, 128>}, {pipeline_mode = #tpu.pipeline_mode<synchronous>, transform_indices = @transform_5, window_bounds = array<i64: 1, 128>}, {pipeline_mode = #tpu.pipeline_mode<synchronous>, transform_indices = @transform_6, window_bounds = array<i64: 1, 128>}, {transform_indices = @transform_7, window_bounds = array<i64: 16, 128>}]} {
    %c0_i32 = arith.constant 0 : i32
    %0 = arith.cmpi eq, %arg1, %c0_i32 : i32
    %1 = arith.extui %0 : i1 to i32
    %c0_i32_0 = arith.constant 0 : i32
    %2 = arith.cmpi ne, %1, %c0_i32_0 : i32
    scf.if %2 {
      %cst_19 = arith.constant 0.000000e+00 : f32
      %30 = vector.broadcast %cst_19 : f32 to vector<16x128xf32>
      %c0_20 = arith.constant 0 : index
      %c0_21 = arith.constant 0 : index
      %31 = vector.load %arg10[%c0_20, %c0_21] : memref<16x128xf32, #tpu.memory_space<vmem>>, vector<16x128xf32>
      tpu.vector_store %arg10[%c0_20, %c0_21], %30 {strides = array<i32>} : memref<16x128xf32, #tpu.memory_space<vmem>>, vector<16x128xf32>,
    } else {
    }
    %c0 = arith.constant 0 : index
    %c0_1 = arith.constant 0 : index
    %3 = vector.load %arg3[%c0, %c0_1] : memref<128x256xf32, #tpu.memory_space<vmem>>, vector<128x256xf32>
    %c0_2 = arith.constant 0 : index
    %c0_3 = arith.constant 0 : index
    %4 = vector.load %arg2[%c0_2, %c0_3] : memref<16x128xf32, #tpu.memory_space<vmem>>, vector<16x128xf32>
    %cst = arith.constant dense<0.000000e+00> : vector<16x256xf32>
    %5 = tpu.matmul %4, %3, %cst {dimension_numbers = #tpu.dot_dimension_numbers<[1], [0], [0], [1], [0, 0, 1, 1], [], []>} : vector<16x128xf32>, vector<128x256xf32>, vector<16x256xf32> -> vector<16x256xf32>
    %c0_4 = arith.constant 0 : index
    %c0_5 = arith.constant 0 : index
    %6 = vector.load %arg4[%c0_4, %c0_5] : memref<1x256xf32, #tpu.memory_space<vmem>>, vector<1x256xf32>
    %7 = vector.broadcast %6 : vector<1x256xf32> to vector<16x256xf32>
    %8 = arith.addf %5, %7 : vector<16x256xf32>
    %9 = arith.mulf %8, %8 : vector<16x256xf32>
    %10 = arith.mulf %8, %9 : vector<16x256xf32>
    %cst_6 = arith.constant 4.471500e-02 : f32
    %11 = vector.broadcast %cst_6 : f32 to vector<16x256xf32>
    %12 = arith.mulf %11, %10 : vector<16x256xf32>
    %13 = arith.addf %8, %12 : vector<16x256xf32>
    %cst_7 = arith.constant 0.797884583 : f32
    %14 = vector.broadcast %cst_7 : f32 to vector<16x256xf32>
    %15 = arith.mulf %14, %13 : vector<16x256xf32>
    %16 = math.tanh %15 : vector<16x256xf32>
    %cst_8 = arith.constant 1.000000e+00 : f32
    %17 = vector.broadcast %cst_8 : f32 to vector<16x256xf32>
    %18 = arith.addf %17, %16 : vector<16x256xf32>
    %cst_9 = arith.constant 5.000000e-01 : f32
    %19 = vector.broadcast %cst_9 : f32 to vector<16x256xf32>
    %20 = arith.mulf %19, %18 : vector<16x256xf32>
    %21 = arith.mulf %8, %20 : vector<16x256xf32>
    %c0_10 = arith.constant 0 : index
    %c0_11 = arith.constant 0 : index
    %22 = vector.load %arg10[%c0_10, %c0_11] : memref<16x128xf32, #tpu.memory_space<vmem>>, vector<16x128xf32>
    %c0_12 = arith.constant 0 : index
    %c0_13 = arith.constant 0 : index
    %23 = vector.load %arg5[%c0_12, %c0_13] : memref<256x128xf32, #tpu.memory_space<vmem>>, vector<256x128xf32>
    %cst_14 = arith.constant dense<0.000000e+00> : vector<16x128xf32>
    %24 = tpu.matmul %21, %23, %cst_14 {dimension_numbers = #tpu.dot_dimension_numbers<[1], [0], [0], [1], [0, 0, 1, 1], [], []>} : vector<16x256xf32>, vector<256x128xf32>, vector<16x128xf32> -> vector<16x128xf32>
    %25 = arith.addf %22, %24 : vector<16x128xf32>
    %c0_15 = arith.constant 0 : index
    %c0_16 = arith.constant 0 : index
    %26 = vector.load %arg10[%c0_15, %c0_16] : memref<16x128xf32, #tpu.memory_space<vmem>>, vector<16x128xf32>
    tpu.vector_store %arg10[%c0_15, %c0_16], %25 {strides = array<i32>} : memref<16x128xf32, #tpu.memory_space<vmem>>, vector<16x128xf32>,
    %c0_i32_17 = arith.constant 0 : i32
    %27 = arith.cmpi eq, %arg1, %c0_i32_17 : i32
    %28 = arith.extui %27 : i1 to i32
    %c0_i32_18 = arith.constant 0 : i32
    %29 = arith.cmpi ne, %28, %c0_i32_18 : i32
    scf.if %29 {
      %c0_19 = arith.constant 0 : index
      %c0_20 = arith.constant 0 : index
      %30 = vector.load %arg10[%c0_19, %c0_20] : memref<16x128xf32, #tpu.memory_space<vmem>>, vector<16x128xf32>
      %c0_21 = arith.constant 0 : index
      %c0_22 = arith.constant 0 : index
      %31 = vector.load %arg6[%c0_21, %c0_22] : memref<1x128xf32, #tpu.memory_space<vmem>>, vector<1x128xf32>
      %32 = vector.broadcast %31 : vector<1x128xf32> to vector<16x128xf32>
      %33 = arith.addf %30, %32 : vector<16x128xf32>
      %c0_23 = arith.constant 0 : index
      %c0_24 = arith.constant 0 : index
      %34 = vector.load %arg2[%c0_23, %c0_24] : memref<16x128xf32, #tpu.memory_space<vmem>>, vector<16x128xf32>
      %35 = arith.addf %33, %34 : vector<16x128xf32>
      %cst_25 = arith.constant dense<0.000000e+00> : vector<16xf32>
      %36 = vector.multi_reduction <add>, %35, %cst_25 [1] : vector<16x128xf32> to vector<16xf32>
      %37 = vector.shape_cast %36 : vector<16xf32> to vector<16x1xf32>
      %cst_26 = arith.constant 1.280000e+02 : f32
      %38 = vector.broadcast %cst_26 : f32 to vector<16x1xf32>
      %39 = arith.divf %37, %38 : vector<16x1xf32>
      %40 = vector.broadcast %39 : vector<16x1xf32> to vector<16x128xf32>
      %41 = arith.subf %35, %40 : vector<16x128xf32>
      %42 = arith.mulf %41, %41 : vector<16x128xf32>
      %cst_27 = arith.constant dense<0.000000e+00> : vector<16xf32>
      %43 = vector.multi_reduction <add>, %42, %cst_27 [1] : vector<16x128xf32> to vector<16xf32>
      %44 = vector.shape_cast %43 : vector<16xf32> to vector<16x1xf32>
      %cst_28 = arith.constant 1.280000e+02 : f32
      %45 = vector.broadcast %cst_28 : f32 to vector<16x1xf32>
      %46 = arith.divf %44, %45 : vector<16x1xf32>
      %cst_29 = arith.constant 9.99999997E-7 : f32
      %47 = vector.broadcast %cst_29 : f32 to vector<16x1xf32>
      %48 = arith.addf %46, %47 : vector<16x1xf32>
      %49 = math.rsqrt %48 : vector<16x1xf32>
      %50 = vector.broadcast %49 : vector<16x1xf32> to vector<16x128xf32>
      %51 = arith.mulf %41, %50 : vector<16x128xf32>
      %c0_30 = arith.constant 0 : index
      %c0_31 = arith.constant 0 : index
      %52 = vector.load %arg7[%c0_30, %c0_31] : memref<1x128xf32, #tpu.memory_space<vmem>>, vector<1x128xf32>
      %53 = vector.broadcast %52 : vector<1x128xf32> to vector<16x128xf32>
      %54 = arith.mulf %51, %53 : vector<16x128xf32>
      %c0_32 = arith.constant 0 : index
      %c0_33 = arith.constant 0 : index
      %55 = vector.load %arg8[%c0_32, %c0_33] : memref<1x128xf32, #tpu.memory_space<vmem>>, vector<1x128xf32>
      %56 = vector.broadcast %55 : vector<1x128xf32> to vector<16x128xf32>
      %57 = arith.addf %54, %56 : vector<16x128xf32>
      %c0_34 = arith.constant 0 : index
      %c0_35 = arith.constant 0 : index
      %58 = vector.load %arg9[%c0_34, %c0_35] : memref<16x128xf32, #tpu.memory_space<vmem>>, vector<16x128xf32>
      tpu.vector_store %arg9[%c0_34, %c0_35], %57 {strides = array<i32>} : memref<16x128xf32, #tpu.memory_space<vmem>>, vector<16x128xf32>,
    } else {
    }
    return
  }
  func.func @transform_0(%arg0: i32, %arg1: i32) -> (i32, i32) {
    %c0_i32 = arith.constant 0 : i32
    %c0_i32_0 = arith.constant 0 : i32
    return %arg0, %c0_i32 : i32, i32
  }
  func.func @transform_1(%arg0: i32, %arg1: i32) -> (i32, i32) {
    %c0_i32 = arith.constant 0 : i32
    %c0_i32_0 = arith.constant 0 : i32
    return %c0_i32, %arg1 : i32, i32
  }
  func.func @transform_2(%arg0: i32, %arg1: i32) -> (i32, i32) {
    %c0_i32 = arith.constant 0 : i32
    %c0_i32_0 = arith.constant 0 : i32
    return %c0_i32, %arg1 : i32, i32
  }
  func.func @transform_3(%arg0: i32, %arg1: i32) -> (i32, i32) {
    %c0_i32 = arith.constant 0 : i32
    %c0_i32_0 = arith.constant 0 : i32
    return %arg1, %c0_i32 : i32, i32
  }
  func.func @transform_4(%arg0: i32, %arg1: i32) -> (i32, i32) {
    %c0_i32 = arith.constant 0 : i32
    %c0_i32_0 = arith.constant 0 : i32
    %c0_i32_1 = arith.constant 0 : i32
    return %c0_i32, %c0_i32_0 : i32, i32
  }
  func.func @transform_5(%arg0: i32, %arg1: i32) -> (i32, i32) {
    %c0_i32 = arith.constant 0 : i32
    %c0_i32_0 = arith.constant 0 : i32
    %c0_i32_1 = arith.constant 0 : i32
    return %c0_i32, %c0_i32_0 : i32, i32
  }
  func.func @transform_6(%arg0: i32, %arg1: i32) -> (i32, i32) {
    %c0_i32 = arith.constant 0 : i32
    %c0_i32_0 = arith.constant 0 : i32
    %c0_i32_1 = arith.constant 0 : i32
    return %c0_i32, %c0_i32_0 : i32, i32
  }
  func.func @transform_7(%arg0: i32, %arg1: i32) -> (i32, i32) {
    %c0_i32 = arith.constant 0 : i32
    %c0_i32_0 = arith.constant 0 : i32
    return %arg0, %c0_i32 : i32, i32
  }
}

</mosaic_0001>

<llo_original>
// kernel: tpu_custom_call.1
$region0: #{tpu_custom_call.1}
  #allocation0 [shape = 'u32[]', space=smem, size = 0x4, offset = 0x4, fixed_abs, tag = 'smem constant byte address 0x4 - core index']
  #allocation1 [shape = 'u32[144,128]{1,0:T(1,128)}', space=vmem, size = 0x12000, scoped, tag = 'internal scratch']
  #allocation2 [shape = 'f32[16,128]{1,0:T(8,128)}', space=vmem, size = 0x2000, scoped, tag = 'scratch operand']
  %s0 = inlined_call_operand.hbm [shape: f32[16,128], index: 0, kind: input, shape index: {}]
  %s1 = inlined_call_operand.hbm [shape: f32[128,256], index: 1, kind: input, shape index: {}]
  %s2 = inlined_call_operand.vmem [shape: f32[1,256], index: 2, kind: input, shape index: {}]
  %s3 = inlined_call_operand.hbm [shape: f32[256,128], index: 3, kind: input, shape index: {}]
  %s4 = inlined_call_operand.vmem [shape: f32[1,128], index: 4, kind: input, shape index: {}]
  %s5 = inlined_call_operand.vmem [shape: f32[1,128], index: 5, kind: input, shape index: {}]
  %s6 = inlined_call_operand.vmem [shape: f32[1,128], index: 6, kind: input, shape index: {}]
  %s7 = inlined_call_operand.hbm [shape: f32[16,128], index: 7, kind: output, shape index: {}]
  %s8 = sld [smem:[#allocation0]]
  $region58: #{tpu_custom_call.1} parent=0
    _
  %s10 = ssub.s32 1, %s8
  %s11 = scalar_select 0, %s10, %s8
  $region1: #{tpu_custom_call.1} parent=0
    #allocation3 [shape = 'u8[8192]{0}', space=vmem, size = 0x2000, scoped, tag = 'input window, operand 0, single buffered']
    #allocation4 [shape = 's32[1]{0}', space=sflag, size = 0x4, scoped, tag = 'scoped memory for tpu_custom_call.1']
    #allocation5 [shape = 's32[1]{0}', space=sflag, size = 0x4, scoped, tag = 'scoped memory for tpu_custom_call.1']
    #allocation6 [shape = 'u8[131072]{0}', space=vmem, size = 0x20000, scoped, tag = 'input window, operand 1, single buffered']
    #allocation7 [shape = 's32[1]{0}', space=sflag, size = 0x4, scoped, tag = 'scoped memory for tpu_custom_call.1']
    #allocation8 [shape = 'u8[131072]{0}', space=vmem, size = 0x20000, scoped, tag = 'input window, operand 3, single buffered']
    #allocation9 [shape = 'u8[8192]{0}', space=vmem, size = 0x2000, scoped, tag = 'output window, operand 0, single buffered']
    %12 = vsyncpa [#allocation4], 0
    %13 = vsyncpa [#allocation7], 0
    %14 = vsyncpa [#allocation5], 0
    // Predicated region
    $region2: #{tpu_custom_call.1} parent=1 // pred_check
      _
    $region3: #{tpu_custom_call.1} parent=1 // pred_check_branch
      %16 = sbr.rel (0) target = $region5
    $region4: #{tpu_custom_call.1} parent=1 // pred_region
      %s18 = ssub.s32 256, 256
      %19 = vsyncadd [#allocation4], %s18
      %s20 = sshll.u32 [#allocation3], 4
      %s21 = int_to_ptr.vmem [resolvable:$true] %s20
      %26 = dma.hbm_to_vmem [thread:$0]  %s0, 256, %s21, [#allocation4], 128, 128, 8
    $region5: #{tpu_custom_call.1} parent=1 // pred_fallthru
      _
    // Predicated region
    $region6: #{tpu_custom_call.1} parent=1 // pred_check
      _
    $region7: #{tpu_custom_call.1} parent=1 // pred_check_branch
      %28 = sbr.rel (0) target = $region9
    $region8: #{tpu_custom_call.1} parent=1 // pred_region
      %s30 = ssub.s32 4096, 4096
      %31 = vsyncadd [#allocation7], %s30
      %s32 = sshll.u32 [#allocation6], 4
      %s33 = int_to_ptr.vmem [resolvable:$true] %s32
      %38 = dma.hbm_to_vmem [thread:$0]  %s1, 4096, %s33, [#allocation7], 256, 256, 16
    $region9: #{tpu_custom_call.1} parent=1 // pred_fallthru
      _
    // Predicated region
    $region10: #{tpu_custom_call.1} parent=1 // pred_check
      _
    $region11: #{tpu_custom_call.1} parent=1 // pred_check_branch
      %40 = sbr.rel (0) target = $region13
    $region12: #{tpu_custom_call.1} parent=1 // pred_region
      _
    $region13: #{tpu_custom_call.1} parent=1 // pred_fallthru
      _
    // Predicated region
    $region14: #{tpu_custom_call.1} parent=1 // pred_check
      _
    $region15: #{tpu_custom_call.1} parent=1 // pred_check_branch
      %42 = sbr.rel (0) target = $region17
    $region16: #{tpu_custom_call.1} parent=1 // pred_region
      %s44 = ssub.s32 4096, 4096
      %45 = vsyncadd [#allocation7], %s44
      %s46 = sshll.u32 [#allocation8], 4
      %s47 = int_to_ptr.vmem [resolvable:$true] %s46
      %52 = dma.hbm_to_vmem [thread:$0]  %s3, 4096, %s47, [#allocation7], 128, 128, 8
    $region17: #{tpu_custom_call.1} parent=1 // pred_fallthru
      _
    // Predicated region
    $region18: #{tpu_custom_call.1} parent=1 // pred_check
      _
    $region19: #{tpu_custom_call.1} parent=1 // pred_check_branch
      %54 = sbr.rel (0) target = $region21
    $region20: #{tpu_custom_call.1} parent=1 // pred_region
      _
    $region21: #{tpu_custom_call.1} parent=1 // pred_fallthru
      _
    // Predicated region
    $region22: #{tpu_custom_call.1} parent=1 // pred_check
      _
    $region23: #{tpu_custom_call.1} parent=1 // pred_check_branch
      %56 = sbr.rel (0) target = $region25
    $region24: #{tpu_custom_call.1} parent=1 // pred_region
      _
    $region25: #{tpu_custom_call.1} parent=1 // pred_fallthru
      _
    // Predicated region
    $region26: #{tpu_custom_call.1} parent=1 // pred_check
      _
    $region27: #{tpu_custom_call.1} parent=1 // pred_check_branch
      %58 = sbr.rel (0) target = $region29
    $region28: #{tpu_custom_call.1} parent=1 // pred_region
      _
    $region29: #{tpu_custom_call.1} parent=1 // pred_fallthru
      _
    // Predicated region
    $region30: #{tpu_custom_call.1} parent=1 // pred_check
      _
    $region31: #{tpu_custom_call.1} parent=1 // pred_check_branch
      %60 = sbr.rel (0) target = $region33
    $region32: #{tpu_custom_call.1} parent=1 // pred_region
      %61 = dma.done [#allocation4], 256
    $region33: #{tpu_custom_call.1} parent=1 // pred_fallthru
      _
    // Predicated region
    $region34: #{tpu_custom_call.1} parent=1 // pred_check
      _
    $region35: #{tpu_custom_call.1} parent=1 // pred_check_branch
      %63 = sbr.rel (0) target = $region37
    $region36: #{tpu_custom_call.1} parent=1 // pred_region
      %64 = dma.done [#allocation7], 4096
    $region37: #{tpu_custom_call.1} parent=1 // pred_fallthru
      _
    // Predicated region
    $region38: #{tpu_custom_call.1} parent=1 // pred_check
      _
    $region39: #{tpu_custom_call.1} parent=1 // pred_check_branch
      %66 = sbr.rel (0) target = $region41
    $region40: #{tpu_custom_call.1} parent=1 // pred_region
      %67 = dma.done [#allocation7], 4096
    $region41: #{tpu_custom_call.1} parent=1 // pred_fallthru
      _
    %p68 = scmp.eq.s32.totalorder 0, 0
    // Predicated region
    $region42: #{tpu_custom_call.1} parent=1 // pred_check
      %p69 = pneg %p68
    $region43: #{tpu_custom_call.1} parent=1 // pred_check_branch
      %71 = sbr.rel (%p69) target = $region45
    $region44: #{tpu_custom_call.1} parent=1 // pred_region
      %72 = vst [vmem:[#allocation2] sm:$0xff] 0.0
      %73 = vst [vmem:[#allocation2 + $0x8] sm:$0xff] 0.0
    $region45: #{tpu_custom_call.1} parent=1 // pred_fallthru
      _
    %v74 = vld [vmem:[#allocation6] sm:$0xff]
    %v75 = vld [vmem:[#allocation6 + $0x8] sm:$0xff]
    %v76 = vld [vmem:[#allocation6 + $0x10] sm:$0xff]
    %v77 = vld [vmem:[#allocation6 + $0x18] sm:$0xff]
    %v78 = vld [vmem:[#allocation6 + $0x20] sm:$0xff]
    %v79 = vld [vmem:[#allocation6 + $0x28] sm:$0xff]
    %v80 = vld [vmem:[#allocation6 + $0x30] sm:$0xff]
    %v81 = vld [vmem:[#allocation6 + $0x38] sm:$0xff]
    %v82 = vld [vmem:[#allocation6 + $0x40] sm:$0xff]
    %v83 = vld [vmem:[#allocation6 + $0x48] sm:$0xff]
    %v84 = vld [vmem:[#allocation6 + $0x50] sm:$0xff]
    %v85 = vld [vmem:[#allocation6 + $0x58] sm:$0xff]
    %v86 = vld [vmem:[#allocation6 + $0x60] sm:$0xff]
    %v87 = vld [vmem:[#allocation6 + $0x68] sm:$0xff]
    %v88 = vld [vmem:[#allocation6 + $0x70] sm:$0xff]
    %v89 = vld [vmem:[#allocation6 + $0x78] sm:$0xff]
    %v90 = vld [vmem:[#allocation6 + $0x80] sm:$0xff]
    %v91 = vld [vmem:[#allocation6 + $0x88] sm:$0xff]
    %v92 = vld [vmem:[#allocation6 + $0x90] sm:$0xff]
    %v93 = vld [vmem:[#allocation6 + $0x98] sm:$0xff]
    %v94 = vld [vmem:[#allocation6 + $0xa0] sm:$0xff]
    %v95 = vld [vmem:[#allocation6 + $0xa8] sm:$0xff]
    %v96 = vld [vmem:[#allocation6 + $0xb0] sm:$0xff]
    %v97 = vld [vmem:[#allocation6 + $0xb8] sm:$0xff]
    %v98 = vld [vmem:[#allocation6 + $0xc0] sm:$0xff]
    %v99 = vld [vmem:[#allocation6 + $0xc8] sm:$0xff]
    %v100 = vld [vmem:[#allocation6 + $0xd0] sm:$0xff]
    %v101 = vld [vmem:[#allocation6 + $0xd8] sm:$0xff]
    %v102 = vld [vmem:[#allocation6 + $0xe0] sm:$0xff]
    %v103 = vld [vmem:[#allocation6 + $0xe8] sm:$0xff]
    %v104 = vld [vmem:[#allocation6 + $0xf0] sm:$0xff]
    %v105 = vld [vmem:[#allocation6 + $0xf8] sm:$0xff]
    %v106 = vld [vmem:[#allocation3] sm:$0xff]
    %v107 = vld [vmem:[#allocation3 + $0x8] sm:$0xff]
    %v108 = vld [vmem:[%s2] sm:$0x3]
    %v110 = vlaneseq
    %v111 = vshrl.u32 %v110, 7
    %v112 = vsub.s32 0, %v111
    %v113 = vrot.slane %v108, %v112
    %v114 = vlaneseq
    %v115 = vshrl.u32 %v114, 7
    %v116 = vsub.s32 1, %v115
    %v117 = vrot.slane %v108, %v116
    %120 = vmatprep.subr.mxu0 %v75
    %121 = vmatpush1.msra.mxu0 %v74
    %122 = vmatprep.subr.mxu0 %v77
    %123 = vmatpush1.msra.mxu0 %v76
    %124 = vmatprep.subr.mxu0 %v79
    %125 = vmatpush1.msra.mxu0 %v78
    %126 = vmatprep.subr.mxu0 %v81
    %127 = vmatpush1.msra.mxu0 %v80
    %128 = vmatprep.subr.mxu0 %v83
    %129 = vmatpush1.msra.mxu0 %v82
    %130 = vmatprep.subr.mxu0 %v85
    %131 = vmatpush1.msra.mxu0 %v84
    %132 = vmatprep.subr.mxu0 %v87
    %133 = vmatpush1.msra.mxu0 %v86
    %134 = vmatprep.subr.mxu0 %v89
    %135 = vmatpush1.msra.mxu0 %v88
    %136 = vmatprep.subr.mxu0 %v91
    %137 = vmatpush1.msra.mxu0 %v90
    %138 = vmatprep.subr.mxu0 %v93
    %139 = vmatpush1.msra.mxu0 %v92
    %140 = vmatprep.subr.mxu0 %v95
    %141 = vmatpush1.msra.mxu0 %v94
    %142 = vmatprep.subr.mxu0 %v97
    %143 = vmatpush1.msra.mxu0 %v96
    %144 = vmatprep.subr.mxu0 %v99
    %145 = vmatpush1.msra.mxu0 %v98
    %146 = vmatprep.subr.mxu0 %v101
    %147 = vmatpush1.msra.mxu0 %v100
    %148 = vmatprep.subr.mxu0 %v103
    %149 = vmatpush1.msra.mxu0 %v102
    %150 = vmatprep.subr.mxu0 %v105
    %151 = vmatpush1.msra.mxu0 %v104
    %152 = vmatprep.subr.mxu0 0.0
    %153 = vmatpush1.msra.mxu0 0.0
    %154 = vmatprep.subr.mxu0 0.0
    %155 = vmatpush1.msra.mxu0 0.0
    %156 = vmatprep.subr.mxu0 0.0
    %157 = vmatpush1.msra.mxu0 0.0
    %158 = vmatprep.subr.mxu0 0.0
    %159 = vmatpush1.msra.mxu0 0.0
    %160 = vmatprep.subr.mxu0 0.0
    %161 = vmatpush1.msra.mxu0 0.0
    %162 = vmatprep.subr.mxu0 0.0
    %163 = vmatpush1.msra.mxu0 0.0
    %164 = vmatprep.subr.mxu0 0.0
    %165 = vmatpush1.msra.mxu0 0.0
    %166 = vmatprep.subr.mxu0 0.0
    %167 = vmatpush1.msra.mxu0 0.0
    %168 = vmatprep.subr.mxu0 0.0
    %169 = vmatpush1.msra.mxu0 0.0
    %170 = vmatprep.subr.mxu0 0.0
    %171 = vmatpush1.msra.mxu0 0.0
    %172 = vmatprep.subr.mxu0 0.0
    %173 = vmatpush1.msra.mxu0 0.0
    %174 = vmatprep.subr.mxu0 0.0
    %175 = vmatpush1.msra.mxu0 0.0
    %176 = vmatprep.subr.mxu0 0.0
    %177 = vmatpush1.msra.mxu0 0.0
    %178 = vmatprep.subr.mxu0 0.0
    %179 = vmatpush1.msra.mxu0 0.0
    %180 = vmatprep.subr.mxu0 0.0
    %181 = vmatpush1.msra.mxu0 0.0
    %182 = vmatprep.subr.mxu0 0.0
    %183 = vmatpush1.msra.mxu0 0.0
    %184 = vmatprep.mubr.f32.mxu0 0.0
    %185 = vmatmul.mubr.f32.gmra.mrb[0].mxu0 %v106
    %v186 = vpop.f32.mrb[0].mxu0
    %v187 = vadd.f32 %v113, %v186
    %v188 = vpop.f32.mrb[0].mxu0
    %v189 = vadd.f32 %v117, %v188
    %190 = vmatprep.mubr.f32.mxu0 0.0
    %191 = vmatmul.mubr.f32.gmra.mrb[0].mxu0 %v107
    %v192 = vpop.f32.mrb[0].mxu0
    %v193 = vadd.f32 %v113, %v192
    %v194 = vpop.f32.mrb[0].mxu0
    %v195 = vadd.f32 %v117, %v194
    %196 = vdwg.mxu0
    %v197 = vmul.f32 %v187, %v187
    %v198 = vmul.f32 %v189, %v189
    %v199 = vmul.f32 %v193, %v193
    %v200 = vmul.f32 %v195, %v195
    %v201 = vmul.f32 %v187, %v197
    %v202 = vmul.f32 %v189, %v198
    %v203 = vmul.f32 %v193, %v199
    %v204 = vmul.f32 %v195, %v200
    %v205 = vmul.f32 %v201, 0.044715
    %v206 = vmul.f32 %v202, 0.044715
    %v207 = vmul.f32 %v203, 0.044715
    %v208 = vmul.f32 %v204, 0.044715
    %v209 = vadd.f32 %v187, %v205
    %v210 = vadd.f32 %v189, %v206
    %v211 = vadd.f32 %v193, %v207
    %v212 = vadd.f32 %v195, %v208
    %v213 = vmul.f32 %v209, 0.7978846
    %v214 = vmul.f32 %v210, 0.7978846
    %v215 = vmul.f32 %v211, 0.7978846
    %v216 = vmul.f32 %v212, 0.7978846
    %v217 = vtanh.pop %v213
    %v218 = vtanh.pop %v214
    %v219 = vtanh.pop %v215
    %v220 = vtanh.pop %v216
    %v221 = vadd.f32 %v217, 1.0
    %v222 = vadd.f32 %v218, 1.0
    %v223 = vadd.f32 %v219, 1.0
    %v224 = vadd.f32 %v220, 1.0
    %v225 = vmul.f32 %v221, 0.5
    %v226 = vmul.f32 %v222, 0.5
    %v227 = vmul.f32 %v223, 0.5
    %v228 = vmul.f32 %v224, 0.5
    %v229 = vmul.f32 %v187, %v225
    %v230 = vmul.f32 %v189, %v226
    %v231 = vmul.f32 %v193, %v227
    %v232 = vmul.f32 %v195, %v228
    %v233 = vld [vmem:[#allocation2] sm:$0xff]
    %v234 = vld [vmem:[#allocation2 + $0x8] sm:$0xff]
    %v235 = vld [vmem:[#allocation8] sm:$0xff]
    %v236 = vld [vmem:[#allocation8 + $0x8] sm:$0xff]
    %v237 = vld [vmem:[#allocation8 + $0x10] sm:$0xff]
    %v238 = vld [vmem:[#allocation8 + $0x18] sm:$0xff]
    %v239 = vld [vmem:[#allocation8 + $0x20] sm:$0xff]
    %v240 = vld [vmem:[#allocation8 + $0x28] sm:$0xff]
    %v241 = vld [vmem:[#allocation8 + $0x30] sm:$0xff]
    %v242 = vld [vmem:[#allocation8 + $0x38] sm:$0xff]
    %v243 = vld [vmem:[#allocation8 + $0x40] sm:$0xff]
    %v244 = vld [vmem:[#allocation8 + $0x48] sm:$0xff]
    %v245 = vld [vmem:[#allocation8 + $0x50] sm:$0xff]
    %v246 = vld [vmem:[#allocation8 + $0x58] sm:$0xff]
    %v247 = vld [vmem:[#allocation8 + $0x60] sm:$0xff]
    %v248 = vld [vmem:[#allocation8 + $0x68] sm:$0xff]
    %v249 = vld [vmem:[#allocation8 + $0x70] sm:$0xff]
    %v250 = vld [vmem:[#allocation8 + $0x78] sm:$0xff]
    %v251 = vld [vmem:[#allocation8 + $0x80] sm:$0xff]
    %v252 = vld [vmem:[#allocation8 + $0x88] sm:$0xff]
    %v253 = vld [vmem:[#allocation8 + $0x90] sm:$0xff]
    %v254 = vld [vmem:[#allocation8 + $0x98] sm:$0xff]
    %v255 = vld [vmem:[#allocation8 + $0xa0] sm:$0xff]
    %v256 = vld [vmem:[#allocation8 + $0xa8] sm:$0xff]
    %v257 = vld [vmem:[#allocation8 + $0xb0] sm:$0xff]
    %v258 = vld [vmem:[#allocation8 + $0xb8] sm:$0xff]
    %v259 = vld [vmem:[#allocation8 + $0xc0] sm:$0xff]
    %v260 = vld [vmem:[#allocation8 + $0xc8] sm:$0xff]
    %v261 = vld [vmem:[#allocation8 + $0xd0] sm:$0xff]
    %v262 = vld [vmem:[#allocation8 + $0xd8] sm:$0xff]
    %v263 = vld [vmem:[#allocation8 + $0xe0] sm:$0xff]
    %v264 = vld [vmem:[#allocation8 + $0xe8] sm:$0xff]
    %v265 = vld [vmem:[#allocation8 + $0xf0] sm:$0xff]
    %v266 = vld [vmem:[#allocation8 + $0xf8] sm:$0xff]
    %267 = vmatprep.subr.mxu0 0.0
    %268 = vmatpush1.msra.mxu0 %v235
    %269 = vmatprep.subr.mxu0 0.0
    %270 = vmatpush1.msra.mxu0 %v236
    %271 = vmatprep.subr.mxu0 0.0
    %272 = vmatpush1.msra.mxu0 %v237
    %273 = vmatprep.subr.mxu0 0.0
    %274 = vmatpush1.msra.mxu0 %v238
    %275 = vmatprep.subr.mxu0 0.0
    %276 = vmatpush1.msra.mxu0 %v239
    %277 = vmatprep.subr.mxu0 0.0
    %278 = vmatpush1.msra.mxu0 %v240
    %279 = vmatprep.subr.mxu0 0.0
    %280 = vmatpush1.msra.mxu0 %v241
    %281 = vmatprep.subr.mxu0 0.0
    %282 = vmatpush1.msra.mxu0 %v242
    %283 = vmatprep.subr.mxu0 0.0
    %284 = vmatpush1.msra.mxu0 %v243
    %285 = vmatprep.subr.mxu0 0.0
    %286 = vmatpush1.msra.mxu0 %v244
    %287 = vmatprep.subr.mxu0 0.0
    %288 = vmatpush1.msra.mxu0 %v245
    %289 = vmatprep.subr.mxu0 0.0
    %290 = vmatpush1.msra.mxu0 %v246
    %291 = vmatprep.subr.mxu0 0.0
    %292 = vmatpush1.msra.mxu0 %v247
    %293 = vmatprep.subr.mxu0 0.0
    %294 = vmatpush1.msra.mxu0 %v248
    %295 = vmatprep.subr.mxu0 0.0
    %296 = vmatpush1.msra.mxu0 %v249
    %297 = vmatprep.subr.mxu0 0.0
    %298 = vmatpush1.msra.mxu0 %v250
    %299 = vmatprep.subr.mxu0 0.0
    %300 = vmatpush1.msra.mxu0 %v251
    %301 = vmatprep.subr.mxu0 0.0
    %302 = vmatpush1.msra.mxu0 %v252
    %303 = vmatprep.subr.mxu0 0.0
    %304 = vmatpush1.msra.mxu0 %v253
    %305 = vmatprep.subr.mxu0 0.0
    %306 = vmatpush1.msra.mxu0 %v254
    %307 = vmatprep.subr.mxu0 0.0
    %308 = vmatpush1.msra.mxu0 %v255
    %309 = vmatprep.subr.mxu0 0.0
    %310 = vmatpush1.msra.mxu0 %v256
    %311 = vmatprep.subr.mxu0 0.0
    %312 = vmatpush1.msra.mxu0 %v257
    %313 = vmatprep.subr.mxu0 0.0
    %314 = vmatpush1.msra.mxu0 %v258
    %315 = vmatprep.subr.mxu0 0.0
    %316 = vmatpush1.msra.mxu0 %v259
    %317 = vmatprep.subr.mxu0 0.0
    %318 = vmatpush1.msra.mxu0 %v260
    %319 = vmatprep.subr.mxu0 0.0
    %320 = vmatpush1.msra.mxu0 %v261
    %321 = vmatprep.subr.mxu0 0.0
    %322 = vmatpush1.msra.mxu0 %v262
    %323 = vmatprep.subr.mxu0 0.0
    %324 = vmatpush1.msra.mxu0 %v263
    %325 = vmatprep.subr.mxu0 0.0
    %326 = vmatpush1.msra.mxu0 %v264
    %327 = vmatprep.subr.mxu0 0.0
    %328 = vmatpush1.msra.mxu0 %v265
    %329 = vmatprep.subr.mxu0 0.0
    %330 = vmatpush1.msra.mxu0 %v266
    %331 = vmatprep.mubr.f32.mxu0 %v230
    %332 = vmatmul.mubr.f32.gmra.mrb[0].mxu0 %v229
    %v333 = vpop.f32.mrb[0].mxu0
    %v334 = vadd.f32 0.0, %v333
    %v335 = vpop.f32.mrb[0].mxu0
    %336 = vmatprep.mubr.f32.mxu0 %v232
    %337 = vmatmul.mubr.f32.gmra.mrb[0].mxu0 %v231
    %v338 = vpop.f32.mrb[0].mxu0
    %v339 = vadd.f32 0.0, %v338
    %v340 = vpop.f32.mrb[0].mxu0
    %341 = vdwg.mxu0
    %v342 = vadd.f32 %v233, %v334
    %v343 = vadd.f32 %v234, %v339
    %344 = vst [vmem:[#allocation2] sm:$0xff] %v342
    %345 = vst [vmem:[#allocation2 + $0x8] sm:$0xff] %v343
    // Predicated region
    $region46: #{tpu_custom_call.1} parent=1 // pred_check
      %p346 = pneg %p68
    $region47: #{tpu_custom_call.1} parent=1 // pred_check_branch
      %348 = sbr.rel (%p346) target = $region49
    $region48: #{tpu_custom_call.1} parent=1 // pred_region
      %v349 = vld [vmem:[#allocation2] sm:$0xff]
      %v350 = vld [vmem:[#allocation2 + $0x8] sm:$0xff]
      %v351 = vld [vmem:[%s4] sm:$0x1]
      %v353 = vlaneseq
      %v354 = vshrl.u32 %v353, 7
      %v355 = vsub.s32 0, %v354
      %v356 = vrot.slane %v351, %v355
      %v358 = vadd.f32 %v349, %v356
      %v359 = vadd.f32 %v350, %v356
      %v360 = vld [vmem:[#allocation3] sm:$0xff]
      %v361 = vld [vmem:[#allocation3 + $0x8] sm:$0xff]
      %v362 = vadd.f32 %v358, %v360
      %v363 = vadd.f32 %v359, %v361
      %364 = vadd.xlane.f32.xlu0 %v362
      %v365 = vpop.xlane.xlu0 %364
      %366 = vadd.xlane.f32.xlu0 %v363
      %v367 = vpop.xlane.xlu0 %366
      %v368 = vrcp.pop 128.0
      %v369 = vmul.f32 %v365, %v368
      %v370 = vmul.f32 %v367, %v368
      %v371 = vsub.f32 %v362, %v369
      %v372 = vsub.f32 %v363, %v370
      %v373 = vmul.f32 %v371, %v371
      %v374 = vmul.f32 %v372, %v372
      %375 = vadd.xlane.f32.xlu0 %v373
      %v376 = vpop.xlane.xlu0 %375
      %377 = vadd.xlane.f32.xlu0 %v374
      %v378 = vpop.xlane.xlu0 %377
      %v379 = vmul.f32 %v376, %v368
      %v380 = vmul.f32 %v378, %v368
      %v381 = vadd.f32 %v379, 1e-06
      %v382 = vadd.f32 %v380, 1e-06
      %v383 = vrsqrt.pop %v381
      %v384 = vrsqrt.pop %v382
      %v385 = vmul.f32 %v371, %v383
      %v386 = vmul.f32 %v372, %v384
      %v387 = vld [vmem:[%s5] sm:$0x1]
      %v389 = vlaneseq
      %v390 = vshrl.u32 %v389, 7
      %v391 = vsub.s32 0, %v390
      %v392 = vrot.slane %v387, %v391
      %v394 = vmul.f32 %v385, %v392
      %v395 = vmul.f32 %v386, %v392
      %v396 = vld [vmem:[%s6] sm:$0x1]
      %v398 = vlaneseq
      %v399 = vshrl.u32 %v398, 7
      %v400 = vsub.s32 0, %v399
      %v401 = vrot.slane %v396, %v400
      %v403 = vadd.f32 %v394, %v401
      %v404 = vadd.f32 %v395, %v401
      %405 = vst [vmem:[#allocation9] sm:$0xff] %v403
      %406 = vst [vmem:[#allocation9 + $0x8] sm:$0xff] %v404
    $region49: #{tpu_custom_call.1} parent=1 // pred_fallthru
      _
    // Predicated region
    $region50: #{tpu_custom_call.1} parent=1 // pred_check
      _
    $region51: #{tpu_custom_call.1} parent=1 // pred_check_branch
      %408 = sbr.rel (0) target = $region53
    $region52: #{tpu_custom_call.1} parent=1 // pred_region
      %s410 = ssub.s32 256, 256
      %411 = vsyncadd [#allocation5], %s410
      %s412 = sshll.u32 [#allocation9], 4
      %s413 = int_to_ptr.vmem [resolvable:$true] %s412
      %418 = dma.vmem_to_hbm [thread:$0]  %s413, 256, %s7, [#allocation5], 128, 128, 8
    $region53: #{tpu_custom_call.1} parent=1 // pred_fallthru
      _
    // Predicated region
    $region54: #{tpu_custom_call.1} parent=1 // pred_check
      _
    $region55: #{tpu_custom_call.1} parent=1 // pred_check_branch
      %420 = sbr.rel (0) target = $region57
    $region56: #{tpu_custom_call.1} parent=1 // pred_region
      %421 = dma.done [#allocation5], 256
    $region57: #{tpu_custom_call.1} parent=1 // pred_fallthru
      _
    %422 = vsyncpa [#allocation4], 1
    %423 = vsyncpa [#allocation7], 1
    %424 = vsyncpa [#allocation5], 1

// kernel: tpu_custom_call.1
$region0: #{tpu_custom_call.1}
  #allocation0 [shape = 'u32[]', space=smem, size = 0x4, offset = 0x4, fixed_abs, tag = 'smem constant byte address 0x4 - core index']
  #allocation1 [shape = 'u32[144,128]{1,0:T(1,128)}', space=vmem, size = 0x12000, scoped, tag = 'internal scratch']
  #allocation2 [shape = 'f32[16,128]{1,0:T(8,128)}', space=vmem, size = 0x2000, scoped, tag = 'scratch operand']
  %s0 = inlined_call_operand.hbm [shape: f32[16,128], index: 0, kind: input, shape index: {}]
  %s1 = inlined_call_operand.hbm [shape: f32[128,256], index: 1, kind: input, shape index: {}]
  %s2 = inlined_call_operand.vmem [shape: f32[1,256], index: 2, kind: input, shape index: {}]
  %s3 = inlined_call_operand.hbm [shape: f32[256,128], index: 3, kind: input, shape index: {}]
  %s4 = inlined_call_operand.vmem [shape: f32[1,128], index: 4, kind: input, shape index: {}]
  %s5 = inlined_call_operand.vmem [shape: f32[1,128], index: 5, kind: input, shape index: {}]
  %s6 = inlined_call_operand.vmem [shape: f32[1,128], index: 6, kind: input, shape index: {}]
  %s7 = inlined_call_operand.hbm [shape: f32[16,128], index: 7, kind: output, shape index: {}]
  %s8 = sld [smem:[#allocation0]]
  $region58: #{tpu_custom_call.1} parent=0
    _
  %s10 = ssub.s32 1, %s8
  %s11 = scalar_select 0, %s10, %s8
  $region1: #{tpu_custom_call.1} parent=0
    #allocation3 [shape = 'u8[8192]{0}', space=vmem, size = 0x2000, scoped, tag = 'input window, operand 0, single buffered']
    #allocation4 [shape = 's32[1]{0}', space=sflag, size = 0x4, scoped, tag = 'scoped memory for tpu_custom_call.1']
    #allocation5 [shape = 's32[1]{0}', space=sflag, size = 0x4, scoped, tag = 'scoped memory for tpu_custom_call.1']
    #allocation6 [shape = 'u8[131072]{0}', space=vmem, size = 0x20000, scoped, tag = 'input window, operand 1, single buffered']
    #allocation7 [shape = 's32[1]{0}', space=sflag, size = 0x4, scoped, tag = 'scoped memory for tpu_custom_call.1']
    #allocation8 [shape = 'u8[131072]{0}', space=vmem, size = 0x20000, scoped, tag = 'input window, operand 3, single buffered']
    #allocation9 [shape = 'u8[8192]{0}', space=vmem, size = 0x2000, scoped, tag = 'output window, operand 0, single buffered']
    %12 = vsyncpa [#allocation4], 0
    %13 = vsyncpa [#allocation7], 0
    %14 = vsyncpa [#allocation5], 0
    // Predicated region
    $region2: #{tpu_custom_call.1} parent=1 // pred_check
      _
    $region3: #{tpu_custom_call.1} parent=1 // pred_check_branch
      %16 = sbr.rel (0) target = $region5
    $region4: #{tpu_custom_call.1} parent=1 // pred_region
      %s18 = ssub.s32 256, 256
      %19 = vsyncadd [#allocation4], %s18
      %s20 = sshll.u32 [#allocation3], 4
      %s21 = int_to_ptr.vmem [resolvable:$true] %s20
      %26 = dma.hbm_to_vmem [thread:$0]  %s0, 256, %s21, [#allocation4], 128, 128, 8
    $region5: #{tpu_custom_call.1} parent=1 // pred_fallthru
      _
    // Predicated region
    $region6: #{tpu_custom_call.1} parent=1 // pred_check
      _
    $region7: #{tpu_custom_call.1} parent=1 // pred_check_branch
      %28 = sbr.rel (0) target = $region9
    $region8: #{tpu_custom_call.1} parent=1 // pred_region
      %s30 = ssub.s32 4096, 4096
      %31 = vsyncadd [#allocation7], %s30
      %s32 = sshll.u32 [#allocation6], 4
      %s33 = int_to_ptr.vmem [resolvable:$true] %s32
      %38 = dma.hbm_to_vmem [thread:$0]  %s1, 4096, %s33, [#allocation7], 256, 256, 16
    $region9: #{tpu_custom_call.1} parent=1 // pred_fallthru
      _
    // Predicated region
    $region10: #{tpu_custom_call.1} parent=1 // pred_check
      _
    $region11: #{tpu_custom_call.1} parent=1 // pred_check_branch
      %40 = sbr.rel (0) target = $region13
    $region12: #{tpu_custom_call.1} parent=1 // pred_region
      _
    $region13: #{tpu_custom_call.1} parent=1 // pred_fallthru
      _
    // Predicated region
    $region14: #{tpu_custom_call.1} parent=1 // pred_check
      _
    $region15: #{tpu_custom_call.1} parent=1 // pred_check_branch
      %42 = sbr.rel (0) target = $region17
    $region16: #{tpu_custom_call.1} parent=1 // pred_region
      %s44 = ssub.s32 4096, 4096
      %45 = vsyncadd [#allocation7], %s44
      %s46 = sshll.u32 [#allocation8], 4
      %s47 = int_to_ptr.vmem [resolvable:$true] %s46
      %52 = dma.hbm_to_vmem [thread:$0]  %s3, 4096, %s47, [#allocation7], 128, 128, 8
    $region17: #{tpu_custom_call.1} parent=1 // pred_fallthru
      _
    // Predicated region
    $region18: #{tpu_custom_call.1} parent=1 // pred_check
      _
    $region19: #{tpu_custom_call.1} parent=1 // pred_check_branch
      %54 = sbr.rel (0) target = $region21
    $region20: #{tpu_custom_call.1} parent=1 // pred_region
      _
    $region21: #{tpu_custom_call.1} parent=1 // pred_fallthru
      _
    // Predicated region
    $region22: #{tpu_custom_call.1} parent=1 // pred_check
      _
    $region23: #{tpu_custom_call.1} parent=1 // pred_check_branch
      %56 = sbr.rel (0) target = $region25
    $region24: #{tpu_custom_call.1} parent=1 // pred_region
      _
    $region25: #{tpu_custom_call.1} parent=1 // pred_fallthru
      _
    // Predicated region
    $region26: #{tpu_custom_call.1} parent=1 // pred_check
      _
    $region27: #{tpu_custom_call.1} parent=1 // pred_check_branch
      %58 = sbr.rel (0) target = $region29
    $region28: #{tpu_custom_call.1} parent=1 // pred_region
      _
    $region29: #{tpu_custom_call.1} parent=1 // pred_fallthru
      _
    // Predicated region
    $region30: #{tpu_custom_call.1} parent=1 // pred_check
      _
    $region31: #{tpu_custom_call.1} parent=1 // pred_check_branch
      %60 = sbr.rel (0) target = $region33
    $region32: #{tpu_custom_call.1} parent=1 // pred_region
      %61 = dma.done [#allocation4], 256
    $region33: #{tpu_custom_call.1} parent=1 // pred_fallthru
      _
    // Predicated region
    $region34: #{tpu_custom_call.1} parent=1 // pred_check
      _
    $region35: #{tpu_custom_call.1} parent=1 // pred_check_branch
      %63 = sbr.rel (0) target = $region37
    $region36: #{tpu_custom_call.1} parent=1 // pred_region
      %64 = dma.done [#allocation7], 4096
    $region37: #{tpu_custom_call.1} parent=1 // pred_fallthru
      _
    // Predicated region
    $region38: #{tpu_custom_call.1} parent=1 // pred_check
      _
    $region39: #{tpu_custom_call.1} parent=1 // pred_check_branch
      %66 = sbr.rel (0) target = $region41
    $region40: #{tpu_custom_call.1} parent=1 // pred_region
      %67 = dma.done [#allocation7], 4096
    $region41: #{tpu_custom_call.1} parent=1 // pred_fallthru
      _
    %p68 = scmp.eq.s32.totalorder 0, 0
    // Predicated region
    $region42: #{tpu_custom_call.1} parent=1 // pred_check
      %p69 = pneg %p68
    $region43: #{tpu_custom_call.1} parent=1 // pred_check_branch
      %71 = sbr.rel (%p69) target = $region45
    $region44: #{tpu_custom_call.1} parent=1 // pred_region
      %72 = vst [vmem:[#allocation2] sm:$0xff] 0.0
      %73 = vst [vmem:[#allocation2 + $0x8] sm:$0xff] 0.0
    $region45: #{tpu_custom_call.1} parent=1 // pred_fallthru
      _
    %v74 = vld [vmem:[#allocation6] sm:$0xff]
    %v75 = vld [vmem:[#allocation6 + $0x8] sm:$0xff]
    %v76 = vld [vmem:[#allocation6 + $0x10] sm:$0xff]
    %v77 = vld [vmem:[#allocation6 + $0x18] sm:$0xff]
    %v78 = vld [vmem:[#allocation6 + $0x20] sm:$0xff]
    %v79 = vld [vmem:[#allocation6 + $0x28] sm:$0xff]
    %v80 = vld [vmem:[#allocation6 + $0x30] sm:$0xff]
    %v81 = vld [vmem:[#allocation6 + $0x38] sm:$0xff]
    %v82 = vld [vmem:[#allocation6 + $0x40] sm:$0xff]
    %v83 = vld [vmem:[#allocation6 + $0x48] sm:$0xff]
    %v84 = vld [vmem:[#allocation6 + $0x50] sm:$0xff]
    %v85 = vld [vmem:[#allocation6 + $0x58] sm:$0xff]
    %v86 = vld [vmem:[#allocation6 + $0x60] sm:$0xff]
    %v87 = vld [vmem:[#allocation6 + $0x68] sm:$0xff]
    %v88 = vld [vmem:[#allocation6 + $0x70] sm:$0xff]
    %v89 = vld [vmem:[#allocation6 + $0x78] sm:$0xff]
    %v90 = vld [vmem:[#allocation6 + $0x80] sm:$0xff]
    %v91 = vld [vmem:[#allocation6 + $0x88] sm:$0xff]
    %v92 = vld [vmem:[#allocation6 + $0x90] sm:$0xff]
    %v93 = vld [vmem:[#allocation6 + $0x98] sm:$0xff]
    %v94 = vld [vmem:[#allocation6 + $0xa0] sm:$0xff]
    %v95 = vld [vmem:[#allocation6 + $0xa8] sm:$0xff]
    %v96 = vld [vmem:[#allocation6 + $0xb0] sm:$0xff]
    %v97 = vld [vmem:[#allocation6 + $0xb8] sm:$0xff]
    %v98 = vld [vmem:[#allocation6 + $0xc0] sm:$0xff]
    %v99 = vld [vmem:[#allocation6 + $0xc8] sm:$0xff]
    %v100 = vld [vmem:[#allocation6 + $0xd0] sm:$0xff]
    %v101 = vld [vmem:[#allocation6 + $0xd8] sm:$0xff]
    %v102 = vld [vmem:[#allocation6 + $0xe0] sm:$0xff]
    %v103 = vld [vmem:[#allocation6 + $0xe8] sm:$0xff]
    %v104 = vld [vmem:[#allocation6 + $0xf0] sm:$0xff]
    %v105 = vld [vmem:[#allocation6 + $0xf8] sm:$0xff]
    %v106 = vld [vmem:[#allocation3] sm:$0xff]
    %v107 = vld [vmem:[#allocation3 + $0x8] sm:$0xff]
    %v108 = vld [vmem:[%s2] sm:$0x3]
    %v110 = vlaneseq
    %v111 = vshrl.u32 %v110, 7
    %v112 = vsub.s32 0, %v111
    %v113 = vrot.slane %v108, %v112
    %v114 = vlaneseq
    %v115 = vshrl.u32 %v114, 7
    %v116 = vsub.s32 1, %v115
    %v117 = vrot.slane %v108, %v116
    %120 = vmatprep.subr.mxu0 %v75
    %121 = vmatpush1.msra.mxu0 %v74
    %122 = vmatprep.subr.mxu0 %v77
    %123 = vmatpush1.msra.mxu0 %v76
    %124 = vmatprep.subr.mxu0 %v79
    %125 = vmatpush1.msra.mxu0 %v78
    %126 = vmatprep.subr.mxu0 %v81
    %127 = vmatpush1.msra.mxu0 %v80
    %128 = vmatprep.subr.mxu0 %v83
    %129 = vmatpush1.msra.mxu0 %v82
    %130 = vmatprep.subr.mxu0 %v85
    %131 = vmatpush1.msra.mxu0 %v84
    %132 = vmatprep.subr.mxu0 %v87
    %133 = vmatpush1.msra.mxu0 %v86
    %134 = vmatprep.subr.mxu0 %v89
    %135 = vmatpush1.msra.mxu0 %v88
    %136 = vmatprep.subr.mxu0 %v91
    %137 = vmatpush1.msra.mxu0 %v90
    %138 = vmatprep.subr.mxu0 %v93
    %139 = vmatpush1.msra.mxu0 %v92
    %140 = vmatprep.subr.mxu0 %v95
    %141 = vmatpush1.msra.mxu0 %v94
    %142 = vmatprep.subr.mxu0 %v97
    %143 = vmatpush1.msra.mxu0 %v96
    %144 = vmatprep.subr.mxu0 %v99
    %145 = vmatpush1.msra.mxu0 %v98
    %146 = vmatprep.subr.mxu0 %v101
    %147 = vmatpush1.msra.mxu0 %v100
    %148 = vmatprep.subr.mxu0 %v103
    %149 = vmatpush1.msra.mxu0 %v102
    %150 = vmatprep.subr.mxu0 %v105
    %151 = vmatpush1.msra.mxu0 %v104
    %152 = vmatprep.subr.mxu0 0.0
    %153 = vmatpush1.msra.mxu0 0.0
    %154 = vmatprep.subr.mxu0 0.0
    %155 = vmatpush1.msra.mxu0 0.0
    %156 = vmatprep.subr.mxu0 0.0
    %157 = vmatpush1.msra.mxu0 0.0
    %158 = vmatprep.subr.mxu0 0.0
    %159 = vmatpush1.msra.mxu0 0.0
    %160 = vmatprep.subr.mxu0 0.0
    %161 = vmatpush1.msra.mxu0 0.0
    %162 = vmatprep.subr.mxu0 0.0
    %163 = vmatpush1.msra.mxu0 0.0
    %164 = vmatprep.subr.mxu0 0.0
    %165 = vmatpush1.msra.mxu0 0.0
    %166 = vmatprep.subr.mxu0 0.0
    %167 = vmatpush1.msra.mxu0 0.0
    %168 = vmatprep.subr.mxu0 0.0
    %169 = vmatpush1.msra.mxu0 0.0
    %170 = vmatprep.subr.mxu0 0.0
    %171 = vmatpush1.msra.mxu0 0.0
    %172 = vmatprep.subr.mxu0 0.0
    %173 = vmatpush1.msra.mxu0 0.0
    %174 = vmatprep.subr.mxu0 0.0
    %175 = vmatpush1.msra.mxu0 0.0
    %176 = vmatprep.subr.mxu0 0.0
    %177 = vmatpush1.msra.mxu0 0.0
    %178 = vmatprep.subr.mxu0 0.0
    %179 = vmatpush1.msra.mxu0 0.0
    %180 = vmatprep.subr.mxu0 0.0
    %181 = vmatpush1.msra.mxu0 0.0
    %182 = vmatprep.subr.mxu0 0.0
    %183 = vmatpush1.msra.mxu0 0.0
    %184 = vmatprep.mubr.f32.mxu0 0.0
    %185 = vmatmul.mubr.f32.gmra.mrb[0].mxu0 %v106
    %v186 = vpop.f32.mrb[0].mxu0
    %v187 = vadd.f32 %v113, %v186
    %v188 = vpop.f32.mrb[0].mxu0
    %v189 = vadd.f32 %v117, %v188
    %190 = vmatprep.mubr.f32.mxu0 0.0
    %191 = vmatmul.mubr.f32.gmra.mrb[0].mxu0 %v107
    %v192 = vpop.f32.mrb[0].mxu0
    %v193 = vadd.f32 %v113, %v192
    %v194 = vpop.f32.mrb[0].mxu0
    %v195 = vadd.f32 %v117, %v194
    %196 = vdwg.mxu0
    %v197 = vmul.f32 %v187, %v187
    %v198 = vmul.f32 %v189, %v189
    %v199 = vmul.f32 %v193, %v193
    %v200 = vmul.f32 %v195, %v195
    %v201 = vmul.f32 %v187, %v197
    %v202 = vmul.f32 %v189, %v198
    %v203 = vmul.f32 %v193, %v199
    %v204 = vmul.f32 %v195, %v200
    %v205 = vmul.f32 %v201, 0.044715
    %v206 = vmul.f32 %v202, 0.044715
    %v207 = vmul.f32 %v203, 0.044715
    %v208 = vmul.f32 %v204, 0.044715
    %v209 = vadd.f32 %v187, %v205
    %v210 = vadd.f32 %v189, %v206
    %v211 = vadd.f32 %v193, %v207
    %v212 = vadd.f32 %v195, %v208
    %v213 = vmul.f32 %v209, 0.7978846
    %v214 = vmul.f32 %v210, 0.7978846
    %v215 = vmul.f32 %v211, 0.7978846
    %v216 = vmul.f32 %v212, 0.7978846
    %v217 = vtanh.pop %v213
    %v218 = vtanh.pop %v214
    %v219 = vtanh.pop %v215
    %v220 = vtanh.pop %v216
    %v221 = vadd.f32 %v217, 1.0
    %v222 = vadd.f32 %v218, 1.0
    %v223 = vadd.f32 %v219, 1.0
    %v224 = vadd.f32 %v220, 1.0
    %v225 = vmul.f32 %v221, 0.5
    %v226 = vmul.f32 %v222, 0.5
    %v227 = vmul.f32 %v223, 0.5
    %v228 = vmul.f32 %v224, 0.5
    %v229 = vmul.f32 %v187, %v225
    %v230 = vmul.f32 %v189, %v226
    %v231 = vmul.f32 %v193, %v227
    %v232 = vmul.f32 %v195, %v228
    %v233 = vld [vmem:[#allocation2] sm:$0xff]
    %v234 = vld [vmem:[#allocation2 + $0x8] sm:$0xff]
    %v235 = vld [vmem:[#allocation8] sm:$0xff]
    %v236 = vld [vmem:[#allocation8 + $0x8] sm:$0xff]
    %v237 = vld [vmem:[#allocation8 + $0x10] sm:$0xff]
    %v238 = vld [vmem:[#allocation8 + $0x18] sm:$0xff]
    %v239 = vld [vmem:[#allocation8 + $0x20] sm:$0xff]
    %v240 = vld [vmem:[#allocation8 + $0x28] sm:$0xff]
    %v241 = vld [vmem:[#allocation8 + $0x30] sm:$0xff]
    %v242 = vld [vmem:[#allocation8 + $0x38] sm:$0xff]
    %v243 = vld [vmem:[#allocation8 + $0x40] sm:$0xff]
    %v244 = vld [vmem:[#allocation8 + $0x48] sm:$0xff]
    %v245 = vld [vmem:[#allocation8 + $0x50] sm:$0xff]
    %v246 = vld [vmem:[#allocation8 + $0x58] sm:$0xff]
    %v247 = vld [vmem:[#allocation8 + $0x60] sm:$0xff]
    %v248 = vld [vmem:[#allocation8 + $0x68] sm:$0xff]
    %v249 = vld [vmem:[#allocation8 + $0x70] sm:$0xff]
    %v250 = vld [vmem:[#allocation8 + $0x78] sm:$0xff]
    %v251 = vld [vmem:[#allocation8 + $0x80] sm:$0xff]
    %v252 = vld [vmem:[#allocation8 + $0x88] sm:$0xff]
    %v253 = vld [vmem:[#allocation8 + $0x90] sm:$0xff]
    %v254 = vld [vmem:[#allocation8 + $0x98] sm:$0xff]
    %v255 = vld [vmem:[#allocation8 + $0xa0] sm:$0xff]
    %v256 = vld [vmem:[#allocation8 + $0xa8] sm:$0xff]
    %v257 = vld [vmem:[#allocation8 + $0xb0] sm:$0xff]
    %v258 = vld [vmem:[#allocation8 + $0xb8] sm:$0xff]
    %v259 = vld [vmem:[#allocation8 + $0xc0] sm:$0xff]
    %v260 = vld [vmem:[#allocation8 + $0xc8] sm:$0xff]
    %v261 = vld [vmem:[#allocation8 + $0xd0] sm:$0xff]
    %v262 = vld [vmem:[#allocation8 + $0xd8] sm:$0xff]
    %v263 = vld [vmem:[#allocation8 + $0xe0] sm:$0xff]
    %v264 = vld [vmem:[#allocation8 + $0xe8] sm:$0xff]
    %v265 = vld [vmem:[#allocation8 + $0xf0] sm:$0xff]
    %v266 = vld [vmem:[#allocation8 + $0xf8] sm:$0xff]
    %267 = vmatprep.subr.mxu0 0.0
    %268 = vmatpush1.msra.mxu0 %v235
    %269 = vmatprep.subr.mxu0 0.0
    %270 = vmatpush1.msra.mxu0 %v236
    %271 = vmatprep.subr.mxu0 0.0
    %272 = vmatpush1.msra.mxu0 %v237
    %273 = vmatprep.subr.mxu0 0.0
    %274 = vmatpush1.msra.mxu0 %v238
    %275 = vmatprep.subr.mxu0 0.0
    %276 = vmatpush1.msra.mxu0 %v239
    %277 = vmatprep.subr.mxu0 0.0
    %278 = vmatpush1.msra.mxu0 %v240
    %279 = vmatprep.subr.mxu0 0.0
    %280 = vmatpush1.msra.mxu0 %v241
    %281 = vmatprep.subr.mxu0 0.0
    %282 = vmatpush1.msra.mxu0 %v242
    %283 = vmatprep.subr.mxu0 0.0
    %284 = vmatpush1.msra.mxu0 %v243
    %285 = vmatprep.subr.mxu0 0.0
    %286 = vmatpush1.msra.mxu0 %v244
    %287 = vmatprep.subr.mxu0 0.0
    %288 = vmatpush1.msra.mxu0 %v245
    %289 = vmatprep.subr.mxu0 0.0
    %290 = vmatpush1.msra.mxu0 %v246
    %291 = vmatprep.subr.mxu0 0.0
    %292 = vmatpush1.msra.mxu0 %v247
    %293 = vmatprep.subr.mxu0 0.0
    %294 = vmatpush1.msra.mxu0 %v248
    %295 = vmatprep.subr.mxu0 0.0
    %296 = vmatpush1.msra.mxu0 %v249
    %297 = vmatprep.subr.mxu0 0.0
    %298 = vmatpush1.msra.mxu0 %v250
    %299 = vmatprep.subr.mxu0 0.0
    %300 = vmatpush1.msra.mxu0 %v251
    %301 = vmatprep.subr.mxu0 0.0
    %302 = vmatpush1.msra.mxu0 %v252
    %303 = vmatprep.subr.mxu0 0.0
    %304 = vmatpush1.msra.mxu0 %v253
    %305 = vmatprep.subr.mxu0 0.0
    %306 = vmatpush1.msra.mxu0 %v254
    %307 = vmatprep.subr.mxu0 0.0
    %308 = vmatpush1.msra.mxu0 %v255
    %309 = vmatprep.subr.mxu0 0.0
    %310 = vmatpush1.msra.mxu0 %v256
    %311 = vmatprep.subr.mxu0 0.0
    %312 = vmatpush1.msra.mxu0 %v257
    %313 = vmatprep.subr.mxu0 0.0
    %314 = vmatpush1.msra.mxu0 %v258
    %315 = vmatprep.subr.mxu0 0.0
    %316 = vmatpush1.msra.mxu0 %v259
    %317 = vmatprep.subr.mxu0 0.0
    %318 = vmatpush1.msra.mxu0 %v260
    %319 = vmatprep.subr.mxu0 0.0
    %320 = vmatpush1.msra.mxu0 %v261
    %321 = vmatprep.subr.mxu0 0.0
    %322 = vmatpush1.msra.mxu0 %v262
    %323 = vmatprep.subr.mxu0 0.0
    %324 = vmatpush1.msra.mxu0 %v263
    %325 = vmatprep.subr.mxu0 0.0
    %326 = vmatpush1.msra.mxu0 %v264
    %327 = vmatprep.subr.mxu0 0.0
    %328 = vmatpush1.msra.mxu0 %v265
    %329 = vmatprep.subr.mxu0 0.0
    %330 = vmatpush1.msra.mxu0 %v266
    %331 = vmatprep.mubr.f32.mxu0 %v230
    %332 = vmatmul.mubr.f32.gmra.mrb[0].mxu0 %v229
    %v333 = vpop.f32.mrb[0].mxu0
    %v334 = vadd.f32 0.0, %v333
    %v335 = vpop.f32.mrb[0].mxu0
    %336 = vmatprep.mubr.f32.mxu0 %v232
    %337 = vmatmul.mubr.f32.gmra.mrb[0].mxu0 %v231
    %v338 = vpop.f32.mrb[0].mxu0
    %v339 = vadd.f32 0.0, %v338
    %v340 = vpop.f32.mrb[0].mxu0
    %341 = vdwg.mxu0
    %v342 = vadd.f32 %v233, %v334
    %v343 = vadd.f32 %v234, %v339
    %344 = vst [vmem:[#allocation2] sm:$0xff] %v342
    %345 = vst [vmem:[#allocation2 + $0x8] sm:$0xff] %v343
    // Predicated region
    $region46: #{tpu_custom_call.1} parent=1 // pred_check
      %p346 = pneg %p68
    $region47: #{tpu_custom_call.1} parent=1 // pred_check_branch
      %348 = sbr.rel (%p346) target = $region49
    $region48: #{tpu_custom_call.1} parent=1 // pred_region
      %v349 = vld [vmem:[#allocation2] sm:$0xff]
      %v350 = vld [vmem:[#allocation2 + $0x8] sm:$0xff]
      %v351 = vld [vmem:[%s4] sm:$0x1]
      %v353 = vlaneseq
      %v354 = vshrl.u32 %v353, 7
      %v355 = vsub.s32 0, %v354
      %v356 = vrot.slane %v351, %v355
      %v358 = vadd.f32 %v349, %v356
      %v359 = vadd.f32 %v350, %v356
      %v360 = vld [vmem:[#allocation3] sm:$0xff]
      %v361 = vld [vmem:[#allocation3 + $0x8] sm:$0xff]
      %v362 = vadd.f32 %v358, %v360
      %v363 = vadd.f32 %v359, %v361
      %364 = vadd.xlane.f32.xlu0 %v362
      %v365 = vpop.xlane.xlu0 %364
      %366 = vadd.xlane.f32.xlu0 %v363
      %v367 = vpop.xlane.xlu0 %366
      %v368 = vrcp.pop 128.0
      %v369 = vmul.f32 %v365, %v368
      %v370 = vmul.f32 %v367, %v368
      %v371 = vsub.f32 %v362, %v369
      %v372 = vsub.f32 %v363, %v370
      %v373 = vmul.f32 %v371, %v371
      %v374 = vmul.f32 %v372, %v372
      %375 = vadd.xlane.f32.xlu0 %v373
      %v376 = vpop.xlane.xlu0 %375
      %377 = vadd.xlane.f32.xlu0 %v374
      %v378 = vpop.xlane.xlu0 %377
      %v379 = vmul.f32 %v376, %v368
      %v380 = vmul.f32 %v378, %v368
      %v381 = vadd.f32 %v379, 1e-06
      %v382 = vadd.f32 %v380, 1e-06
      %v383 = vrsqrt.pop %v381
      %v384 = vrsqrt.pop %v382
      %v385 = vmul.f32 %v371, %v383
      %v386 = vmul.f32 %v372, %v384
      %v387 = vld [vmem:[%s5] sm:$0x1]
      %v389 = vlaneseq
      %v390 = vshrl.u32 %v389, 7
      %v391 = vsub.s32 0, %v390
      %v392 = vrot.slane %v387, %v391
      %v394 = vmul.f32 %v385, %v392
      %v395 = vmul.f32 %v386, %v392
      %v396 = vld [vmem:[%s6] sm:$0x1]
      %v398 = vlaneseq
      %v399 = vshrl.u32 %v398, 7
      %v400 = vsub.s32 0, %v399
      %v401 = vrot.slane %v396, %v400
      %v403 = vadd.f32 %v394, %v401
      %v404 = vadd.f32 %v395, %v401
      %405 = vst [vmem:[#allocation9] sm:$0xff] %v403
      %406 = vst [vmem:[#allocation9 + $0x8] sm:$0xff] %v404
    $region49: #{tpu_custom_call.1} parent=1 // pred_fallthru
      _
    // Predicated region
    $region50: #{tpu_custom_call.1} parent=1 // pred_check
      _
    $region51: #{tpu_custom_call.1} parent=1 // pred_check_branch
      %408 = sbr.rel (0) target = $region53
    $region52: #{tpu_custom_call.1} parent=1 // pred_region
      %s410 = ssub.s32 256, 256
      %411 = vsyncadd [#allocation5], %s410
      %s412 = sshll.u32 [#allocation9], 4
      %s413 = int_to_ptr.vmem [resolvable:$true] %s412
      %418 = dma.vmem_to_hbm [thread:$0]  %s413, 256, %s7, [#allocation5], 128, 128, 8
    $region53: #{tpu_custom_call.1} parent=1 // pred_fallthru
      _
    // Predicated region
    $region54: #{tpu_custom_call.1} parent=1 // pred_check
      _
    $region55: #{tpu_custom_call.1} parent=1 // pred_check_branch
      %420 = sbr.rel (0) target = $region57
    $region56: #{tpu_custom_call.1} parent=1 // pred_region
      %421 = dma.done [#allocation5], 256
    $region57: #{tpu_custom_call.1} parent=1 // pred_fallthru
      _
    %422 = vsyncpa [#allocation4], 1
    %423 = vsyncpa [#allocation7], 1
    %424 = vsyncpa [#allocation5], 1

</llo_original>
